<compile_context>
chip_gen: v7x
topology: tpu7x:2x2x1
jax: 0.10.0
libtpu: 0.0.40
codegen_flags: <defaults>
</compile_context>

<pallas_src>
import functools

import numpy as np
import jax
import jax.numpy as jnp
from jax import lax
from jax.experimental import pallas as pl
from jax.experimental.pallas import tpu as pltpu


# ----------------------------- Pallas kernel -----------------------------
def _cel_kernel(x_ref, t_ref, loss_ref, *, n_valid_rows):
    # x_ref   : (Nt, Dp) f32  logits tile (padded columns are ~ -1e30)
    # t_ref   : (Nt, 1)  i32  target class per row
    # loss_ref: (1, 1)   f32  resident accumulator / final output
    pid = pl.program_id(0)

    @pl.when(pid == 0)
    def _init():
        loss_ref[...] = jnp.zeros_like(loss_ref)

    x = x_ref[...]                                         # (Nt, Dp)
    nt, dp = x.shape

    m = jnp.max(x, axis=1, keepdims=True)                  # (Nt, 1)
    xs = x - m                                             # shifted logits
    lse = jnp.log(jnp.sum(jnp.exp(xs), axis=1, keepdims=True))   # (Nt, 1)

    col = lax.broadcasted_iota(jnp.int32, (nt, dp), 1)     # class index per lane
    picked = jnp.sum(jnp.where(col == t_ref[...], xs, 0.0),
                     axis=1, keepdims=True)                # (Nt, 1) == xs[i, t_i]

    row = lax.broadcasted_iota(jnp.int32, (nt, 1), 0) + pid * nt
    valid = (row < n_valid_rows).astype(jnp.float32)       # mask padded rows

    per_row = (lse - picked) * valid                       # (Nt, 1)
    loss_ref[...] += jnp.sum(per_row, keepdims=True)       # (1, 1)


# ----------------------------- Wrapper -----------------------------
@functools.partial(jax.jit, static_argnames=("block_rows",))
def cel_loss(logits, targets, *, block_rows=512):
    """Cross-entropy loss (sum reduction), matching the PyTorch CEL module."""
    N, D = logits.shape

    # Lane-dense class dim: pad to a multiple of 128 with a very negative value.
    Dp = pl.cdiv(D, 128) * 128
    # Row tile: multiple of 8 sublanes, capped at block_rows; many rows per grid
    # step amortizes the ~0.35 us/step overhead and fills the vregs.
    Nt = min(block_rows, pl.cdiv(N, 8) * 8)
    Np = pl.cdiv(N, Nt) * Nt

    x = jnp.pad(logits.astype(jnp.float32),
                ((0, Np - N), (0, Dp - D)), constant_values=-1e30)
    t = jnp.pad(targets.astype(jnp.int32), ((0, Np - N),)).reshape(Np, 1)

    out = pl.pallas_call(
        functools.partial(_cel_kernel, n_valid_rows=N),
        out_shape=jax.ShapeDtypeStruct((1, 1), jnp.float32),
        grid_spec=pltpu.PrefetchScalarGridSpec(
            num_scalar_prefetch=0,
            grid=(Np // Nt,),
            in_specs=[
                pl.BlockSpec((Nt, Dp), lambda i: (i, 0)),
                pl.BlockSpec((Nt, 1), lambda i: (i, 0)),
            ],
            out_specs=pl.BlockSpec((1, 1), lambda i: (0, 0)),
        ),
        # single scalar accumulator across the grid => reduction axis
        compiler_params=pltpu.CompilerParams(dimension_semantics=("arbitrary",)),
    )(x, t)
    return out[0, 0]


# ----------------------------- Pure-JAX reference -----------------------------
def cel_ref(logits, targets):
    x = logits - jnp.max(logits, axis=1, keepdims=True)
    s = jnp.sum(jnp.exp(x), axis=1)
    return jnp.sum(jnp.log(s)) - jnp.sum(x[jnp.arange(x.shape[0]), targets])


if __name__ == "__main__":
    key = jax.random.PRNGKey(0)
    k1, k2, k3, k4 = jax.random.split(key, 4)

    # Small shapes consistent with the module: (N, D) logits + integer targets.
    N, D = 8, 32
    x = jax.random.normal(k1, (N, D), jnp.float32)
    t = jax.random.randint(k2, (N,), 0, D, jnp.int32)

    loss = jax.block_until_ready(cel_loss(x, t))
    ref = jax.block_until_ready(cel_ref(x, t))
    np.testing.assert_allclose(np.asarray(loss), np.asarray(ref),
                               rtol=1e-5, atol=1e-5)

    # Second case with awkward (non-aligned) shapes to exercise the padding/masking.
    N2, D2 = 10, 33
    x2 = jax.random.normal(k3, (N2, D2), jnp.float32) * 3.0
    t2 = jax.random.randint(k4, (N2,), 0, D2, jnp.int32)
    loss2 = jax.block_until_ready(cel_loss(x2, t2))
    ref2 = jax.block_until_ready(cel_ref(x2, t2))
    np.testing.assert_allclose(np.asarray(loss2), np.asarray(ref2),
                               rtol=1e-5, atol=1e-5)

    print("KERNEL_OK")
</pallas_src>

<mosaic_0001>
module attributes {stable_mosaic.version = 11 : i64} {
  func.func @_cel_kernel(%arg0: i32, %arg1: memref<8x128xf32, #tpu.memory_space<vmem>>, %arg2: memref<8x1xi32, #tpu.memory_space<vmem>>, %arg3: memref<1x1xf32, #tpu.memory_space<vmem>>) attributes {dimension_semantics = [#tpu.dimension_semantics<arbitrary>], iteration_bounds = array<i64: 1>, scalar_prefetch = 0 : i64, scratch_operands = 0 : i64, tpu.core_type = #tpu.core_type<tc>, window_params = [{transform_indices = @transform_0, window_bounds = array<i64: 8, 128>}, {transform_indices = @transform_1, window_bounds = array<i64: 8, 1>}, {pipeline_mode = #tpu.pipeline_mode<synchronous>, transform_indices = @transform_2, window_bounds = array<i64: 1, 1>}]} {
    %c0_i32 = arith.constant 0 : i32
    %0 = arith.cmpi eq, %arg0, %c0_i32 : i32
    %1 = arith.extui %0 : i1 to i32
    %c0_i32_0 = arith.constant 0 : i32
    %2 = arith.cmpi ne, %1, %c0_i32_0 : i32
    scf.if %2 {
      %cst_13 = arith.constant 0.000000e+00 : f32
      %38 = vector.broadcast %cst_13 : f32 to vector<1x1xf32>
      %c0_14 = arith.constant 0 : index
      %c0_15 = arith.constant 0 : index
      %39 = vector.load %arg3[%c0_14, %c0_15] : memref<1x1xf32, #tpu.memory_space<vmem>>, vector<1x1xf32>
      tpu.vector_store %arg3[%c0_14, %c0_15], %38 {strides = array<i32>} : memref<1x1xf32, #tpu.memory_space<vmem>>, vector<1x1xf32>,
    } else {
    }
    %c0 = arith.constant 0 : index
    %c0_1 = arith.constant 0 : index
    %3 = vector.load %arg1[%c0, %c0_1] : memref<8x128xf32, #tpu.memory_space<vmem>>, vector<8x128xf32>
    %cst = arith.constant dense<0xFF800000> : vector<8xf32>
    %4 = vector.multi_reduction <maximumf>, %3, %cst [1] : vector<8x128xf32> to vector<8xf32>
    %5 = vector.shape_cast %4 : vector<8xf32> to vector<8x1xf32>
    %6 = vector.broadcast %5 : vector<8x1xf32> to vector<8x128xf32>
    %7 = arith.subf %3, %6 : vector<8x128xf32>
    %8 = math.exp %7 : vector<8x128xf32>
    %cst_2 = arith.constant dense<0.000000e+00> : vector<8xf32>
    %9 = vector.multi_reduction <add>, %8, %cst_2 [1] : vector<8x128xf32> to vector<8xf32>
    %10 = vector.shape_cast %9 : vector<8xf32> to vector<8x1xf32>
    %11 = math.log %10 : vector<8x1xf32>
    %12 = tpu.iota {dimensions = array<i32: 1>} : vector<8x128xi32>
    %c0_3 = arith.constant 0 : index
    %c0_4 = arith.constant 0 : index
    %13 = vector.load %arg2[%c0_3, %c0_4] : memref<8x1xi32, #tpu.memory_space<vmem>>, vector<8x1xi32>
    %14 = vector.broadcast %13 : vector<8x1xi32> to vector<8x128xi32>
    %15 = arith.cmpi eq, %12, %14 : vector<8x128xi32>
    %cst_5 = arith.constant 0.000000e+00 : f32
    %16 = vector.broadcast %cst_5 : f32 to vector<8x128xf32>
    %17 = arith.select %15, %7, %16 : vector<8x128xi1>, vector<8x128xf32>
    %cst_6 = arith.constant dense<0.000000e+00> : vector<8xf32>
    %18 = vector.multi_reduction <add>, %17, %cst_6 [1] : vector<8x128xf32> to vector<8xf32>
    %19 = vector.shape_cast %18 : vector<8xf32> to vector<8x1xf32>
    %20 = tpu.iota {dimensions = array<i32: 0>} : vector<8x1xi32>
    %c8_i32 = arith.constant 8 : i32
    %21 = arith.muli %arg0, %c8_i32 : i32
    %22 = vector.broadcast %21 : i32 to vector<8x1xi32>
    %23 = arith.addi %20, %22 : vector<8x1xi32>
    %c8_i32_7 = arith.constant 8 : i32
    %24 = vector.broadcast %c8_i32_7 : i32 to vector<8x1xi32>
    %25 = arith.cmpi slt, %23, %24 : vector<8x1xi32>
    %26 = arith.extui %25 : vector<8x1xi1> to vector<8x1xi32>
    %27 = arith.sitofp %26 : vector<8x1xi32> to vector<8x1xf32>
    %28 = arith.subf %11, %19 : vector<8x1xf32>
    %29 = arith.mulf %28, %27 : vector<8x1xf32>
    %c0_8 = arith.constant 0 : index
    %c0_9 = arith.constant 0 : index
    %30 = vector.load %arg3[%c0_8, %c0_9] : memref<1x1xf32, #tpu.memory_space<vmem>>, vector<1x1xf32>
    %31 = vector.shape_cast %29 : vector<8x1xf32> to vector<1x8x1xf32>
    %cst_10 = arith.constant dense<0.000000e+00> : vector<1xf32>
    %32 = vector.multi_reduction <add>, %31, %cst_10 [1, 2] : vector<1x8x1xf32> to vector<1xf32>
    %33 = vector.shape_cast %32 : vector<1xf32> to vector<1x1x1xf32>
    %34 = vector.extract %33[0, 0, 0] : f32 from vector<1x1x1xf32>
    %35 = vector.broadcast %34 : f32 to vector<1x1xf32>
    %36 = arith.addf %30, %35 : vector<1x1xf32>
    %c0_11 = arith.constant 0 : index
    %c0_12 = arith.constant 0 : index
    %37 = vector.load %arg3[%c0_11, %c0_12] : memref<1x1xf32, #tpu.memory_space<vmem>>, vector<1x1xf32>
    tpu.vector_store %arg3[%c0_11, %c0_12], %36 {strides = array<i32>} : memref<1x1xf32, #tpu.memory_space<vmem>>, vector<1x1xf32>,
    return
  }
  func.func @transform_0(%arg0: i32) -> (i32, i32) {
    %c0_i32 = arith.constant 0 : i32
    %c0_i32_0 = arith.constant 0 : i32
    return %arg0, %c0_i32 : i32, i32
  }
  func.func @transform_1(%arg0: i32) -> (i32, i32) {
    %c0_i32 = arith.constant 0 : i32
    %c0_i32_0 = arith.constant 0 : i32
    return %arg0, %c0_i32 : i32, i32
  }
  func.func @transform_2(%arg0: i32) -> (i32, i32) {
    %c0_i32 = arith.constant 0 : i32
    %c0_i32_0 = arith.constant 0 : i32
    %c0_i32_1 = arith.constant 0 : i32
    return %c0_i32, %c0_i32_0 : i32, i32
  }
}

</mosaic_0001>

<llo_original>
// kernel: cel_loss.1
$region0: #{cel_loss.1}
  #allocation0 [shape = 'u32[]', space=smem, size = 0x4, offset = 0x4, fixed_abs, tag = 'smem constant byte address 0x4 - core index']
  #allocation1 [shape = 'u32[144,128]{1,0:T(1,128)}', space=vmem, size = 0x12000, scoped, tag = 'internal scratch']
  %s0 = inlined_call_operand.vmem [shape: f32[8,128], index: 0, kind: input, shape index: {}]
  %s1 = inlined_call_operand.vmem [shape: s32[8,1], index: 1, kind: input, shape index: {}]
  %s2 = inlined_call_operand.hbm [shape: f32[1,1], index: 2, kind: output, shape index: {}]
  %s3 = sld [smem:[#allocation0]]
  $region22: #{cel_loss.1} parent=0
    _
  %s5 = ssub.s32 1, %s3
  %s6 = scalar_select 0, %s5, %s3
  $region1: #{cel_loss.1} parent=0
    #allocation2 [shape = 'u8[512]{0}', space=vmem, size = 0x400, scoped, tag = 'output window, operand 0, single buffered']
    #allocation3 [shape = 's32[1]{0}', space=sflag, size = 0x4, scoped, tag = 'scoped memory for cel_loss.1']
    %7 = vsyncpa [#allocation3], 0
    // Predicated region
    $region2: #{cel_loss.1} parent=1 // pred_check
      _
    $region3: #{cel_loss.1} parent=1 // pred_check_branch
      %9 = sbr.rel (0) target = $region5
    $region4: #{cel_loss.1} parent=1 // pred_region
      _
    $region5: #{cel_loss.1} parent=1 // pred_fallthru
      _
    // Predicated region
    $region6: #{cel_loss.1} parent=1 // pred_check
      _
    $region7: #{cel_loss.1} parent=1 // pred_check_branch
      %11 = sbr.rel (0) target = $region9
    $region8: #{cel_loss.1} parent=1 // pred_region
      _
    $region9: #{cel_loss.1} parent=1 // pred_fallthru
      _
    %p12 = scmp.eq.s32.totalorder 0, 0
    // Predicated region
    $region10: #{cel_loss.1} parent=1 // pred_check
      %p13 = pneg %p12
    $region11: #{cel_loss.1} parent=1 // pred_check_branch
      %15 = sbr.rel (%p13) target = $region13
    $region12: #{cel_loss.1} parent=1 // pred_region
      %vm16 = vcmask 0
      %17 = vst.msk [vmem:[#allocation2] sm:$0x1] %vm16, 0.0
    $region13: #{cel_loss.1} parent=1 // pred_fallthru
      _
    %v18 = vld [vmem:[%s0] sm:$0xff]
    %19 = vmax.xlane.f32.xlu0 %v18
    %v20 = vpop.xlane.xlu0 %19
    %v21 = vsub.f32 %v18, %v20
    %v22 = vmul.f32 %v21, 1.442695
    %v23 = vpow.pop %v22
    %24 = vadd.xlane.f32.xlu0 %v23
    %v25 = vpop.xlane.xlu0 %24
    %v26 = vlog2.pop %v25
    %v27 = vmul.f32 %v26, 0.6931472
    %v28 = vlaneseq
    %v29 = vand.u32 %v28, 127
    %v30 = vld [vmem:[%s1] sm:$0xff]
    %31 = vset.pattern.permute.xlu0 0
    %32 = vperm.xlu0 %31, %v30
    %v33 = vpop.permute.xlu0 %32
    %vm34 = vcmp.eq.s32.totalorder %v29, %v33
    %v35 = vsel %vm34, %v21, 0.0
    %36 = vadd.xlane.f32.xlu0 %v35
    %v37 = vpop.xlane.xlu0 %36
    %v38 = vlaneseq
    %v39 = vshrl.u32 %v38, 7
    %s40 = smul.u32 0, 8
    %v41 = vstv %s40
    %v42 = vadd.s32 %v39, %v41
    %vm43 = vcmp.lt.s32.totalorder %v42, 8
    %v44 = vsel %vm43, 1, 0
    %v45 = vcvt.s32.f32 %v44
    %v46 = vsub.f32 %v27, %v37
    %v47 = vmul.f32 %v46, %v45
    %v48 = vld [vmem:[#allocation2] sm:$0x1]
    %vm49 = vcmask 7168
    %v50 = vsel %vm49, %v47, 0.0
    %51 = vadd.xlane.f32.xlu0 %v50
    %v52 = vpop.xlane.xlu0 %51
    %v53 = vrot.slane %v52, 4
    %v54 = vadd.f32 %v52, %v53
    %v55 = vrot.slane %v54, 2
    %v56 = vadd.f32 %v54, %v55
    %v57 = vrot.slane %v56, 1
    %v58 = vadd.f32 %v56, %v57
    %s59 = vtos %v58
    %v60 = vstv %s59
    %v61 = vadd.f32 %v48, %v60
    %vm62 = vcmask 0
    %63 = vst.msk [vmem:[#allocation2] sm:$0x1] %vm62, %v61
    // Predicated region
    $region14: #{cel_loss.1} parent=1 // pred_check
      _
    $region15: #{cel_loss.1} parent=1 // pred_check_branch
      %65 = sbr.rel (0) target = $region17
    $region16: #{cel_loss.1} parent=1 // pred_region
      %s67 = ssub.s32 16, 16
      %68 = vsyncadd [#allocation3], %s67
      %s70 = sshll.u32 [#allocation2], 4
      %s71 = int_to_ptr.vmem [resolvable:$true] %s70
      %73 = dma.vmem_to_hbm [thread:$0]  %s71, 16, %s2, [#allocation3]
    $region17: #{cel_loss.1} parent=1 // pred_fallthru
      _
    // Predicated region
    $region18: #{cel_loss.1} parent=1 // pred_check
      _
    $region19: #{cel_loss.1} parent=1 // pred_check_branch
      %75 = sbr.rel (0) target = $region21
    $region20: #{cel_loss.1} parent=1 // pred_region
      %76 = dma.done [#allocation3], 16
    $region21: #{cel_loss.1} parent=1 // pred_fallthru
      _
    %77 = vsyncpa [#allocation3], 1

</llo_original>
